<compile_context>
chip_gen: v5e
topology: v5e:2x2
jax: 0.10.0
libtpu: 0.0.40
codegen_flags: <defaults>
</compile_context>

<pallas_src>
import functools

import jax
import jax.numpy as jnp
from jax.experimental import pallas as pl
from jax.experimental.pallas import tpu as pltpu


def _peep_lstm_kernel(
    tok_ref,     # (T*B, 1) int32: tokens, t-major / b-minor
    table_ref,   # (3, 4H)  f32  : per-token x-side gate pre-acts [f | i | o | sig(c)]
    wfio_ref,    # (H, 3H)  mxu_dtype: fused recurrent weights [W_fh | W_ih | W_oh]
    wph_ref,     # (H, C)   f32  : projection
    wpb_ref,     # (1, C)   f32  : projection bias
    out_ref,     # (B, C)   f32  : log-probs
    *,
    seq_length: int,
    batch_size: int,
    hidden_dim: int,
    mxu_dtype,
):
    T, B, H = seq_length, batch_size, hidden_dim
    f32 = jnp.float32
    dot = functools.partial(jnp.dot, preferred_element_type=f32)

    # --- In-kernel token gather: one-hot select against the 3-row table (VPU). ---
    tok = tok_ref[...]                                    # (T*B, 1) int32
    table = table_ref[...]                                # (3, 4H)  f32
    xg = ((tok == 0).astype(f32) * table[0:1, :]
          + (tok == 1).astype(f32) * table[1:2, :]
          + (tok == 2).astype(f32) * table[2:3, :])       # (T*B, 4H) f32

    w_fio = wfio_ref[...]                                 # (H, 3H), loaded once

    c = jnp.zeros((B, H), f32)
    g = xg[0:B, :]
    r = jnp.zeros((B, 3 * H), f32)

    # Fully unrolled recurrence: one fused (B,H)x(H,3H) MXU op, one fused
    # sigmoid and one FMA per step.  Only c recurs (peephole); o/h are hoisted.
    for t in range(T):
        g = xg[t * B:(t + 1) * B, :]                      # (B, 4H) x-side pre-acts
        r = dot(c.astype(mxu_dtype), w_fio)               # (B, 3H) = [r_f | r_i | r_o]
        fi = jax.nn.sigmoid(g[:, 0:2 * H] + r[:, 0:2 * H])   # (B, 2H) fused f/i
        c = g[:, 3 * H:4 * H] * fi[:, H:2 * H] + c * fi[:, 0:H]

    # Final-step output gate (uses c_{T-1} via the last r) and hidden state.
    o = jax.nn.sigmoid(g[:, 2 * H:3 * H] + r[:, 2 * H:3 * H])
    h = jnp.tanh(c) * o

    # Projection + log_softmax epilogue (single f32 matmul, off the recurrence).
    logits = dot(h, wph_ref[...]) + wpb_ref[...]          # (B, C)
    z = logits - jnp.max(logits, axis=1, keepdims=True)
    out_ref[...] = z - jnp.log(jnp.sum(jnp.exp(z), axis=1, keepdims=True))


def peep_lstm_forward(x_tokens, params, *, hidden_dim, num_classes,
                      mxu_dtype=jnp.bfloat16):
    """x_tokens: (B, T, 1) int32 in [0, 3). Returns (B, num_classes) log-probs."""
    B, T, _ = x_tokens.shape
    H, C = hidden_dim, num_classes

    # (3, 4H) token -> x-side gate pre-activation table [f | i | o | sig(c)].
    # The candidate gate has no recurrent term, so it is pre-activated here.
    w_x = jnp.concatenate(
        [params["W_fx"], params["W_ix"], params["W_ox"], params["W_cx"]], axis=1)
    b_x = jnp.concatenate(
        [params["W_fb"], params["W_ib"], params["W_ob"], params["W_cb"]], axis=1)
    gate_table = params["embedding"].astype(jnp.float32) @ w_x + b_x      # (3, 4H)
    gate_table = jnp.concatenate(
        [gate_table[:, :3 * H], jax.nn.sigmoid(gate_table[:, 3 * H:])], axis=1)

    # Fused recurrent weights [W_fh | W_ih | W_oh]; cast operands for the MXU.
    w_fio = jnp.concatenate(
        [params["W_fh"], params["W_ih"], params["W_oh"]], axis=1).astype(mxu_dtype)

    # Tokens, t-major / b-minor, as a tiny int32 VMEM input.
    tokens_flat = jnp.transpose(x_tokens[:, :, 0], (1, 0)).reshape(T * B, 1)
    tokens_flat = tokens_flat.astype(jnp.int32)

    vmem = pl.BlockSpec(memory_space=pltpu.MemorySpace.VMEM)
    kernel = functools.partial(
        _peep_lstm_kernel, seq_length=T, batch_size=B, hidden_dim=H,
        mxu_dtype=mxu_dtype)

    cost = pl.CostEstimate(
        flops=2 * T * B * H * 3 * H + 2 * B * H * C + 12 * T * B * 4 * H,
        transcendentals=T * B * 2 * H + 2 * B * H + B * C,
        bytes_accessed=4 * (T * B + 3 * 4 * H + H * 3 * H + H * C + C + B * C),
    )

    return pl.pallas_call(
        kernel,
        out_shape=jax.ShapeDtypeStruct((B, C), jnp.float32),
        in_specs=[vmem, vmem, vmem, vmem, vmem],
        out_specs=vmem,
        cost_estimate=cost,
    )(tokens_flat, gate_table, w_fio, params["W_ph"], params["W_pb"])


def peep_lstm_reference(x_tokens, params, *, hidden_dim, num_classes):
    """Pure-JAX reference mirroring the PyTorch forward."""
    B, T, _ = x_tokens.shape
    c_t = jnp.zeros((B, hidden_dim), jnp.float32)
    h_t = jnp.zeros((B, hidden_dim), jnp.float32)
    for t in range(T):
        e = params["embedding"][x_tokens[:, t, 0]]            # (B, E)
        f = jax.nn.sigmoid(e @ params["W_fx"] + c_t @ params["W_fh"] + params["W_fb"][0])
        i = jax.nn.sigmoid(e @ params["W_ix"] + c_t @ params["W_ih"] + params["W_ib"][0])
        o = jax.nn.sigmoid(e @ params["W_ox"] + c_t @ params["W_oh"] + params["W_ob"][0])
        c_t = jax.nn.sigmoid(e @ params["W_cx"] + params["W_cb"][0]) * i + c_t * f
        h_t = jnp.tanh(c_t) * o
    p = h_t @ params["W_ph"] + params["W_pb"][0]
    return jax.nn.log_softmax(p, axis=1)


def init_params(key, *, embedding_dim, hidden_dim, num_classes):
    """Deterministic init matching the module: kaiming_normal_ for 2-D
    parameters (std = sqrt(2 / fan_in), fan_in = shape[1]), zeros for 1-D."""
    def kaiming(k, shape):
        std = (2.0 / shape[1]) ** 0.5
        return std * jax.random.normal(k, shape, jnp.float32)

    keys = jax.random.split(key, 8)
    E, H, C = embedding_dim, hidden_dim, num_classes
    return {
        "embedding": kaiming(keys[0], (3, E)),
        "W_fx": kaiming(keys[1], (E, H)), "W_fh": kaiming(keys[2], (H, H)),
        "W_fb": jnp.zeros((1, H), jnp.float32),
        "W_ix": kaiming(keys[3], (E, H)), "W_ih": kaiming(keys[4], (H, H)),
        "W_ib": jnp.zeros((1, H), jnp.float32),
        "W_ox": kaiming(keys[5], (E, H)), "W_oh": kaiming(keys[6], (H, H)),
        "W_ob": jnp.zeros((1, H), jnp.float32),
        "W_cx": kaiming(keys[7], (E, H)),
        "W_cb": jnp.zeros((1, H), jnp.float32),
        "W_ph": kaiming(jax.random.fold_in(key, 99), (H, C)),
        "W_pb": jnp.zeros((1, C), jnp.float32),
    }


if __name__ == "__main__":
    batch_size = 4
    seq_length = 8
    input_dim = 1
    hidden_dim = 32
    num_classes = 10
    embedding_dim = 64

    key = jax.random.PRNGKey(0)
    k_params, k_x = jax.random.split(key)

    params = init_params(
        k_params, embedding_dim=embedding_dim,
        hidden_dim=hidden_dim, num_classes=num_classes,
    )
    x = jax.random.randint(
        k_x, (batch_size, seq_length, input_dim), 0, 3, dtype=jnp.int32
    )

    # jit the wrapper so the table/concat/transpose glue fuses with the call.
    fwd_bf16 = jax.jit(functools.partial(
        peep_lstm_forward, hidden_dim=hidden_dim, num_classes=num_classes))
    fwd_f32 = jax.jit(functools.partial(
        peep_lstm_forward, hidden_dim=hidden_dim, num_classes=num_classes,
        mxu_dtype=jnp.float32))

    y_ref = peep_lstm_reference(x, params, hidden_dim=hidden_dim,
                                num_classes=num_classes)

    # Strict correctness check with f32 MXU operands.
    y32 = jax.block_until_ready(fwd_f32(x, params))
    assert y32.shape == (batch_size, num_classes)
    assert jnp.allclose(y32, y_ref, atol=1e-5, rtol=1e-5)

    # Fast path: bf16 recurrent-matmul operands (elementwise math stays f32);
    # checked against the f32 reference at a bf16-appropriate tolerance.
    y16 = jax.block_until_ready(fwd_bf16(x, params))
    assert y16.shape == (batch_size, num_classes)
    assert jnp.allclose(y16, y_ref, atol=1e-1)

    print("KERNEL_OK")
</pallas_src>

<mosaic_0001>
module attributes {stable_mosaic.version = 11 : i64} {
  func.func @_peep_lstm_kernel(%arg0: memref<32x1xi32, #tpu.memory_space<vmem>>, %arg1: memref<3x128xf32, #tpu.memory_space<vmem>>, %arg2: memref<32x96xf32, #tpu.memory_space<vmem>>, %arg3: memref<32x10xf32, #tpu.memory_space<vmem>>, %arg4: memref<1x10xf32, #tpu.memory_space<vmem>>, %arg5: memref<4x10xf32, #tpu.memory_space<vmem>>) attributes {dimension_semantics = [], scalar_prefetch = 0 : i64, scratch_operands = 0 : i64, tpu.core_type = #tpu.core_type<tc>} {
    %c0 = arith.constant 0 : index
    %c0_0 = arith.constant 0 : index
    %0 = vector.load %arg0[%c0, %c0_0] : memref<32x1xi32, #tpu.memory_space<vmem>>, vector<32x1xi32>
    %c0_1 = arith.constant 0 : index
    %c0_2 = arith.constant 0 : index
    %1 = vector.load %arg1[%c0_1, %c0_2] : memref<3x128xf32, #tpu.memory_space<vmem>>, vector<3x128xf32>
    %c0_i32 = arith.constant 0 : i32
    %2 = vector.broadcast %c0_i32 : i32 to vector<32x1xi32>
    %3 = arith.cmpi eq, %0, %2 : vector<32x1xi32>
    %4 = arith.extui %3 : vector<32x1xi1> to vector<32x1xi32>
    %5 = arith.sitofp %4 : vector<32x1xi32> to vector<32x1xf32>
    %6 = vector.extract_strided_slice %1 {offsets = [0, 0], sizes = [1, 128], strides = [1, 1]} : vector<3x128xf32> to vector<1x128xf32>
    %7 = vector.broadcast %5 : vector<32x1xf32> to vector<32x128xf32>
    %8 = vector.broadcast %6 : vector<1x128xf32> to vector<32x128xf32>
    %9 = arith.mulf %7, %8 : vector<32x128xf32>
    %c1_i32 = arith.constant 1 : i32
    %10 = vector.broadcast %c1_i32 : i32 to vector<32x1xi32>
    %11 = arith.cmpi eq, %0, %10 : vector<32x1xi32>
    %12 = arith.extui %11 : vector<32x1xi1> to vector<32x1xi32>
    %13 = arith.sitofp %12 : vector<32x1xi32> to vector<32x1xf32>
    %14 = vector.extract_strided_slice %1 {offsets = [1, 0], sizes = [1, 128], strides = [1, 1]} : vector<3x128xf32> to vector<1x128xf32>
    %15 = vector.broadcast %13 : vector<32x1xf32> to vector<32x128xf32>
    %16 = vector.broadcast %14 : vector<1x128xf32> to vector<32x128xf32>
    %17 = arith.mulf %15, %16 : vector<32x128xf32>
    %18 = arith.addf %9, %17 : vector<32x128xf32>
    %c2_i32 = arith.constant 2 : i32
    %19 = vector.broadcast %c2_i32 : i32 to vector<32x1xi32>
    %20 = arith.cmpi eq, %0, %19 : vector<32x1xi32>
    %21 = arith.extui %20 : vector<32x1xi1> to vector<32x1xi32>
    %22 = arith.sitofp %21 : vector<32x1xi32> to vector<32x1xf32>
    %23 = vector.extract_strided_slice %1 {offsets = [2, 0], sizes = [1, 128], strides = [1, 1]} : vector<3x128xf32> to vector<1x128xf32>
    %24 = vector.broadcast %22 : vector<32x1xf32> to vector<32x128xf32>
    %25 = vector.broadcast %23 : vector<1x128xf32> to vector<32x128xf32>
    %26 = arith.mulf %24, %25 : vector<32x128xf32>
    %27 = arith.addf %18, %26 : vector<32x128xf32>
    %c0_3 = arith.constant 0 : index
    %c0_4 = arith.constant 0 : index
    %28 = vector.load %arg2[%c0_3, %c0_4] : memref<32x96xf32, #tpu.memory_space<vmem>>, vector<32x96xf32>
    %cst = arith.constant 0.000000e+00 : f32
    %29 = vector.broadcast %cst : f32 to vector<4x32xf32>
    %30 = vector.extract_strided_slice %27 {offsets = [0, 0], sizes = [4, 128], strides = [1, 1]} : vector<32x128xf32> to vector<4x128xf32>
    %cst_5 = arith.constant dense<0.000000e+00> : vector<4x96xf32>
    %31 = tpu.matmul %29, %28, %cst_5 {dimension_numbers = #tpu.dot_dimension_numbers<[1], [0], [0], [1], [0, 0, 1, 1], [], []>} : vector<4x32xf32>, vector<32x96xf32>, vector<4x96xf32> -> vector<4x96xf32>
    %32 = vector.extract_strided_slice %30 {offsets = [0, 0], sizes = [4, 64], strides = [1, 1]} : vector<4x128xf32> to vector<4x64xf32>
    %33 = vector.extract_strided_slice %31 {offsets = [0, 0], sizes = [4, 64], strides = [1, 1]} : vector<4x96xf32> to vector<4x64xf32>
    %34 = arith.addf %32, %33 : vector<4x64xf32>
    %35 = arith.negf %34 : vector<4x64xf32>
    %36 = math.exp %35 : vector<4x64xf32>
    %cst_6 = arith.constant 1.000000e+00 : f32
    %37 = vector.broadcast %cst_6 : f32 to vector<4x64xf32>
    %38 = arith.addf %37, %36 : vector<4x64xf32>
    %39 = arith.divf %37, %38 : vector<4x64xf32>
    %40 = vector.extract_strided_slice %30 {offsets = [0, 96], sizes = [4, 32], strides = [1, 1]} : vector<4x128xf32> to vector<4x32xf32>
    %41 = vector.extract_strided_slice %39 {offsets = [0, 32], sizes = [4, 32], strides = [1, 1]} : vector<4x64xf32> to vector<4x32xf32>
    %42 = arith.mulf %40, %41 : vector<4x32xf32>
    %43 = vector.extract_strided_slice %39 {offsets = [0, 0], sizes = [4, 32], strides = [1, 1]} : vector<4x64xf32> to vector<4x32xf32>
    %44 = arith.mulf %29, %43 : vector<4x32xf32>
    %45 = arith.addf %42, %44 : vector<4x32xf32>
    %46 = vector.extract_strided_slice %27 {offsets = [4, 0], sizes = [4, 128], strides = [1, 1]} : vector<32x128xf32> to vector<4x128xf32>
    %cst_7 = arith.constant dense<0.000000e+00> : vector<4x96xf32>
    %47 = tpu.matmul %45, %28, %cst_7 {dimension_numbers = #tpu.dot_dimension_numbers<[1], [0], [0], [1], [0, 0, 1, 1], [], []>} : vector<4x32xf32>, vector<32x96xf32>, vector<4x96xf32> -> vector<4x96xf32>
    %48 = vector.extract_strided_slice %46 {offsets = [0, 0], sizes = [4, 64], strides = [1, 1]} : vector<4x128xf32> to vector<4x64xf32>
    %49 = vector.extract_strided_slice %47 {offsets = [0, 0], sizes = [4, 64], strides = [1, 1]} : vector<4x96xf32> to vector<4x64xf32>
    %50 = arith.addf %48, %49 : vector<4x64xf32>
    %51 = arith.negf %50 : vector<4x64xf32>
    %52 = math.exp %51 : vector<4x64xf32>
    %cst_8 = arith.constant 1.000000e+00 : f32
    %53 = vector.broadcast %cst_8 : f32 to vector<4x64xf32>
    %54 = arith.addf %53, %52 : vector<4x64xf32>
    %55 = arith.divf %53, %54 : vector<4x64xf32>
    %56 = vector.extract_strided_slice %46 {offsets = [0, 96], sizes = [4, 32], strides = [1, 1]} : vector<4x128xf32> to vector<4x32xf32>
    %57 = vector.extract_strided_slice %55 {offsets = [0, 32], sizes = [4, 32], strides = [1, 1]} : vector<4x64xf32> to vector<4x32xf32>
    %58 = arith.mulf %56, %57 : vector<4x32xf32>
    %59 = vector.extract_strided_slice %55 {offsets = [0, 0], sizes = [4, 32], strides = [1, 1]} : vector<4x64xf32> to vector<4x32xf32>
    %60 = arith.mulf %45, %59 : vector<4x32xf32>
    %61 = arith.addf %58, %60 : vector<4x32xf32>
    %62 = vector.extract_strided_slice %27 {offsets = [8, 0], sizes = [4, 128], strides = [1, 1]} : vector<32x128xf32> to vector<4x128xf32>
    %cst_9 = arith.constant dense<0.000000e+00> : vector<4x96xf32>
    %63 = tpu.matmul %61, %28, %cst_9 {dimension_numbers = #tpu.dot_dimension_numbers<[1], [0], [0], [1], [0, 0, 1, 1], [], []>} : vector<4x32xf32>, vector<32x96xf32>, vector<4x96xf32> -> vector<4x96xf32>
    %64 = vector.extract_strided_slice %62 {offsets = [0, 0], sizes = [4, 64], strides = [1, 1]} : vector<4x128xf32> to vector<4x64xf32>
    %65 = vector.extract_strided_slice %63 {offsets = [0, 0], sizes = [4, 64], strides = [1, 1]} : vector<4x96xf32> to vector<4x64xf32>
    %66 = arith.addf %64, %65 : vector<4x64xf32>
    %67 = arith.negf %66 : vector<4x64xf32>
    %68 = math.exp %67 : vector<4x64xf32>
    %cst_10 = arith.constant 1.000000e+00 : f32
    %69 = vector.broadcast %cst_10 : f32 to vector<4x64xf32>
    %70 = arith.addf %69, %68 : vector<4x64xf32>
    %71 = arith.divf %69, %70 : vector<4x64xf32>
    %72 = vector.extract_strided_slice %62 {offsets = [0, 96], sizes = [4, 32], strides = [1, 1]} : vector<4x128xf32> to vector<4x32xf32>
    %73 = vector.extract_strided_slice %71 {offsets = [0, 32], sizes = [4, 32], strides = [1, 1]} : vector<4x64xf32> to vector<4x32xf32>
    %74 = arith.mulf %72, %73 : vector<4x32xf32>
    %75 = vector.extract_strided_slice %71 {offsets = [0, 0], sizes = [4, 32], strides = [1, 1]} : vector<4x64xf32> to vector<4x32xf32>
    %76 = arith.mulf %61, %75 : vector<4x32xf32>
    %77 = arith.addf %74, %76 : vector<4x32xf32>
    %78 = vector.extract_strided_slice %27 {offsets = [12, 0], sizes = [4, 128], strides = [1, 1]} : vector<32x128xf32> to vector<4x128xf32>
    %cst_11 = arith.constant dense<0.000000e+00> : vector<4x96xf32>
    %79 = tpu.matmul %77, %28, %cst_11 {dimension_numbers = #tpu.dot_dimension_numbers<[1], [0], [0], [1], [0, 0, 1, 1], [], []>} : vector<4x32xf32>, vector<32x96xf32>, vector<4x96xf32> -> vector<4x96xf32>
    %80 = vector.extract_strided_slice %78 {offsets = [0, 0], sizes = [4, 64], strides = [1, 1]} : vector<4x128xf32> to vector<4x64xf32>
    %81 = vector.extract_strided_slice %79 {offsets = [0, 0], sizes = [4, 64], strides = [1, 1]} : vector<4x96xf32> to vector<4x64xf32>
    %82 = arith.addf %80, %81 : vector<4x64xf32>
    %83 = arith.negf %82 : vector<4x64xf32>
    %84 = math.exp %83 : vector<4x64xf32>
    %cst_12 = arith.constant 1.000000e+00 : f32
    %85 = vector.broadcast %cst_12 : f32 to vector<4x64xf32>
    %86 = arith.addf %85, %84 : vector<4x64xf32>
    %87 = arith.divf %85, %86 : vector<4x64xf32>
    %88 = vector.extract_strided_slice %78 {offsets = [0, 96], sizes = [4, 32], strides = [1, 1]} : vector<4x128xf32> to vector<4x32xf32>
    %89 = vector.extract_strided_slice %87 {offsets = [0, 32], sizes = [4, 32], strides = [1, 1]} : vector<4x64xf32> to vector<4x32xf32>
    %90 = arith.mulf %88, %89 : vector<4x32xf32>
    %91 = vector.extract_strided_slice %87 {offsets = [0, 0], sizes = [4, 32], strides = [1, 1]} : vector<4x64xf32> to vector<4x32xf32>
    %92 = arith.mulf %77, %91 : vector<4x32xf32>
    %93 = arith.addf %90, %92 : vector<4x32xf32>
    %94 = vector.extract_strided_slice %27 {offsets = [16, 0], sizes = [4, 128], strides = [1, 1]} : vector<32x128xf32> to vector<4x128xf32>
    %cst_13 = arith.constant dense<0.000000e+00> : vector<4x96xf32>
    %95 = tpu.matmul %93, %28, %cst_13 {dimension_numbers = #tpu.dot_dimension_numbers<[1], [0], [0], [1], [0, 0, 1, 1], [], []>} : vector<4x32xf32>, vector<32x96xf32>, vector<4x96xf32> -> vector<4x96xf32>
    %96 = vector.extract_strided_slice %94 {offsets = [0, 0], sizes = [4, 64], strides = [1, 1]} : vector<4x128xf32> to vector<4x64xf32>
    %97 = vector.extract_strided_slice %95 {offsets = [0, 0], sizes = [4, 64], strides = [1, 1]} : vector<4x96xf32> to vector<4x64xf32>
    %98 = arith.addf %96, %97 : vector<4x64xf32>
    %99 = arith.negf %98 : vector<4x64xf32>
    %100 = math.exp %99 : vector<4x64xf32>
    %cst_14 = arith.constant 1.000000e+00 : f32
    %101 = vector.broadcast %cst_14 : f32 to vector<4x64xf32>
    %102 = arith.addf %101, %100 : vector<4x64xf32>
    %103 = arith.divf %101, %102 : vector<4x64xf32>
    %104 = vector.extract_strided_slice %94 {offsets = [0, 96], sizes = [4, 32], strides = [1, 1]} : vector<4x128xf32> to vector<4x32xf32>
    %105 = vector.extract_strided_slice %103 {offsets = [0, 32], sizes = [4, 32], strides = [1, 1]} : vector<4x64xf32> to vector<4x32xf32>
    %106 = arith.mulf %104, %105 : vector<4x32xf32>
    %107 = vector.extract_strided_slice %103 {offsets = [0, 0], sizes = [4, 32], strides = [1, 1]} : vector<4x64xf32> to vector<4x32xf32>
    %108 = arith.mulf %93, %107 : vector<4x32xf32>
    %109 = arith.addf %106, %108 : vector<4x32xf32>
    %110 = vector.extract_strided_slice %27 {offsets = [20, 0], sizes = [4, 128], strides = [1, 1]} : vector<32x128xf32> to vector<4x128xf32>
    %cst_15 = arith.constant dense<0.000000e+00> : vector<4x96xf32>
    %111 = tpu.matmul %109, %28, %cst_15 {dimension_numbers = #tpu.dot_dimension_numbers<[1], [0], [0], [1], [0, 0, 1, 1], [], []>} : vector<4x32xf32>, vector<32x96xf32>, vector<4x96xf32> -> vector<4x96xf32>
    %112 = vector.extract_strided_slice %110 {offsets = [0, 0], sizes = [4, 64], strides = [1, 1]} : vector<4x128xf32> to vector<4x64xf32>
    %113 = vector.extract_strided_slice %111 {offsets = [0, 0], sizes = [4, 64], strides = [1, 1]} : vector<4x96xf32> to vector<4x64xf32>
    %114 = arith.addf %112, %113 : vector<4x64xf32>
    %115 = arith.negf %114 : vector<4x64xf32>
    %116 = math.exp %115 : vector<4x64xf32>
    %cst_16 = arith.constant 1.000000e+00 : f32
    %117 = vector.broadcast %cst_16 : f32 to vector<4x64xf32>
    %118 = arith.addf %117, %116 : vector<4x64xf32>
    %119 = arith.divf %117, %118 : vector<4x64xf32>
    %120 = vector.extract_strided_slice %110 {offsets = [0, 96], sizes = [4, 32], strides = [1, 1]} : vector<4x128xf32> to vector<4x32xf32>
    %121 = vector.extract_strided_slice %119 {offsets = [0, 32], sizes = [4, 32], strides = [1, 1]} : vector<4x64xf32> to vector<4x32xf32>
    %122 = arith.mulf %120, %121 : vector<4x32xf32>
    %123 = vector.extract_strided_slice %119 {offsets = [0, 0], sizes = [4, 32], strides = [1, 1]} : vector<4x64xf32> to vector<4x32xf32>
    %124 = arith.mulf %109, %123 : vector<4x32xf32>
    %125 = arith.addf %122, %124 : vector<4x32xf32>
    %126 = vector.extract_strided_slice %27 {offsets = [24, 0], sizes = [4, 128], strides = [1, 1]} : vector<32x128xf32> to vector<4x128xf32>
    %cst_17 = arith.constant dense<0.000000e+00> : vector<4x96xf32>
    %127 = tpu.matmul %125, %28, %cst_17 {dimension_numbers = #tpu.dot_dimension_numbers<[1], [0], [0], [1], [0, 0, 1, 1], [], []>} : vector<4x32xf32>, vector<32x96xf32>, vector<4x96xf32> -> vector<4x96xf32>
    %128 = vector.extract_strided_slice %126 {offsets = [0, 0], sizes = [4, 64], strides = [1, 1]} : vector<4x128xf32> to vector<4x64xf32>
    %129 = vector.extract_strided_slice %127 {offsets = [0, 0], sizes = [4, 64], strides = [1, 1]} : vector<4x96xf32> to vector<4x64xf32>
    %130 = arith.addf %128, %129 : vector<4x64xf32>
    %131 = arith.negf %130 : vector<4x64xf32>
    %132 = math.exp %131 : vector<4x64xf32>
    %cst_18 = arith.constant 1.000000e+00 : f32
    %133 = vector.broadcast %cst_18 : f32 to vector<4x64xf32>
    %134 = arith.addf %133, %132 : vector<4x64xf32>
    %135 = arith.divf %133, %134 : vector<4x64xf32>
    %136 = vector.extract_strided_slice %126 {offsets = [0, 96], sizes = [4, 32], strides = [1, 1]} : vector<4x128xf32> to vector<4x32xf32>
    %137 = vector.extract_strided_slice %135 {offsets = [0, 32], sizes = [4, 32], strides = [1, 1]} : vector<4x64xf32> to vector<4x32xf32>
    %138 = arith.mulf %136, %137 : vector<4x32xf32>
    %139 = vector.extract_strided_slice %135 {offsets = [0, 0], sizes = [4, 32], strides = [1, 1]} : vector<4x64xf32> to vector<4x32xf32>
    %140 = arith.mulf %125, %139 : vector<4x32xf32>
    %141 = arith.addf %138, %140 : vector<4x32xf32>
    %142 = vector.extract_strided_slice %27 {offsets = [28, 0], sizes = [4, 128], strides = [1, 1]} : vector<32x128xf32> to vector<4x128xf32>
    %cst_19 = arith.constant dense<0.000000e+00> : vector<4x96xf32>
    %143 = tpu.matmul %141, %28, %cst_19 {dimension_numbers = #tpu.dot_dimension_numbers<[1], [0], [0], [1], [0, 0, 1, 1], [], []>} : vector<4x32xf32>, vector<32x96xf32>, vector<4x96xf32> -> vector<4x96xf32>
    %144 = vector.extract_strided_slice %142 {offsets = [0, 0], sizes = [4, 64], strides = [1, 1]} : vector<4x128xf32> to vector<4x64xf32>
    %145 = vector.extract_strided_slice %143 {offsets = [0, 0], sizes = [4, 64], strides = [1, 1]} : vector<4x96xf32> to vector<4x64xf32>
    %146 = arith.addf %144, %145 : vector<4x64xf32>
    %147 = arith.negf %146 : vector<4x64xf32>
    %148 = math.exp %147 : vector<4x64xf32>
    %cst_20 = arith.constant 1.000000e+00 : f32
    %149 = vector.broadcast %cst_20 : f32 to vector<4x64xf32>
    %150 = arith.addf %149, %148 : vector<4x64xf32>
    %151 = arith.divf %149, %150 : vector<4x64xf32>
    %152 = vector.extract_strided_slice %142 {offsets = [0, 96], sizes = [4, 32], strides = [1, 1]} : vector<4x128xf32> to vector<4x32xf32>
    %153 = vector.extract_strided_slice %151 {offsets = [0, 32], sizes = [4, 32], strides = [1, 1]} : vector<4x64xf32> to vector<4x32xf32>
    %154 = arith.mulf %152, %153 : vector<4x32xf32>
    %155 = vector.extract_strided_slice %151 {offsets = [0, 0], sizes = [4, 32], strides = [1, 1]} : vector<4x64xf32> to vector<4x32xf32>
    %156 = arith.mulf %141, %155 : vector<4x32xf32>
    %157 = arith.addf %154, %156 : vector<4x32xf32>
    %158 = vector.extract_strided_slice %142 {offsets = [0, 64], sizes = [4, 32], strides = [1, 1]} : vector<4x128xf32> to vector<4x32xf32>
    %159 = vector.extract_strided_slice %143 {offsets = [0, 64], sizes = [4, 32], strides = [1, 1]} : vector<4x96xf32> to vector<4x32xf32>
    %160 = arith.addf %158, %159 : vector<4x32xf32>
    %161 = arith.negf %160 : vector<4x32xf32>
    %162 = math.exp %161 : vector<4x32xf32>
    %cst_21 = arith.constant 1.000000e+00 : f32
    %163 = vector.broadcast %cst_21 : f32 to vector<4x32xf32>
    %164 = arith.addf %163, %162 : vector<4x32xf32>
    %165 = arith.divf %163, %164 : vector<4x32xf32>
    %166 = math.tanh %157 : vector<4x32xf32>
    %167 = arith.mulf %166, %165 : vector<4x32xf32>
    %c0_22 = arith.constant 0 : index
    %c0_23 = arith.constant 0 : index
    %168 = vector.load %arg3[%c0_22, %c0_23] : memref<32x10xf32, #tpu.memory_space<vmem>>, vector<32x10xf32>
    %cst_24 = arith.constant dense<0.000000e+00> : vector<4x10xf32>
    %169 = tpu.matmul %167, %168, %cst_24 {dimension_numbers = #tpu.dot_dimension_numbers<[1], [0], [0], [1], [0, 0, 1, 1], [], []>} : vector<4x32xf32>, vector<32x10xf32>, vector<4x10xf32> -> vector<4x10xf32>
    %c0_25 = arith.constant 0 : index
    %c0_26 = arith.constant 0 : index
    %170 = vector.load %arg4[%c0_25, %c0_26] : memref<1x10xf32, #tpu.memory_space<vmem>>, vector<1x10xf32>
    %171 = vector.broadcast %170 : vector<1x10xf32> to vector<4x10xf32>
    %172 = arith.addf %169, %171 : vector<4x10xf32>
    %cst_27 = arith.constant dense<0xFF800000> : vector<4xf32>
    %173 = vector.multi_reduction <maximumf>, %172, %cst_27 [1] : vector<4x10xf32> to vector<4xf32>
    %174 = vector.shape_cast %173 : vector<4xf32> to vector<4x1xf32>
    %175 = vector.broadcast %174 : vector<4x1xf32> to vector<4x10xf32>
    %176 = arith.subf %172, %175 : vector<4x10xf32>
    %177 = math.exp %176 : vector<4x10xf32>
    %cst_28 = arith.constant dense<0.000000e+00> : vector<4xf32>
    %178 = vector.multi_reduction <add>, %177, %cst_28 [1] : vector<4x10xf32> to vector<4xf32>
    %179 = vector.shape_cast %178 : vector<4xf32> to vector<4x1xf32>
    %180 = math.log %179 : vector<4x1xf32>
    %181 = vector.broadcast %180 : vector<4x1xf32> to vector<4x10xf32>
    %182 = arith.subf %176, %181 : vector<4x10xf32>
    %c0_29 = arith.constant 0 : index
    %c0_30 = arith.constant 0 : index
    %183 = vector.load %arg5[%c0_29, %c0_30] : memref<4x10xf32, #tpu.memory_space<vmem>>, vector<4x10xf32>
    tpu.vector_store %arg5[%c0_29, %c0_30], %182 {strides = array<i32>} : memref<4x10xf32, #tpu.memory_space<vmem>>, vector<4x10xf32>,
    return
  }
}

</mosaic_0001>

<llo_original>
// kernel: peep_lstm_forward.1
$region0: #{peep_lstm_forward.1}
  #allocation0 [shape = 'u32[]', space=smem, size = 0x4, offset = 0x4, fixed_abs, tag = 'smem constant byte address 0x4 - core index']
  #allocation1 [shape = 'u32[72,128]{1,0:T(1,128)}', space=vmem, size = 0x9000, scoped, tag = 'internal scratch']
  %s0 = inlined_call_operand.vmem [shape: s32[32,1], index: 0, kind: input, shape index: {}]
  %s1 = inlined_call_operand.vmem [shape: f32[3,128], index: 1, kind: input, shape index: {}]
  %s2 = inlined_call_operand.vmem [shape: f32[32,96], index: 2, kind: input, shape index: {}]
  %s3 = inlined_call_operand.vmem [shape: f32[32,10], index: 3, kind: input, shape index: {}]
  %s4 = inlined_call_operand.vmem [shape: f32[1,10], index: 4, kind: input, shape index: {}]
  %s5 = inlined_call_operand.hbm [shape: f32[4,10], index: 5, kind: output, shape index: {}]
  %s6 = sld [smem:[#allocation0]]
  $region30: #{peep_lstm_forward.1} parent=0
    _
  %s8 = ssub.s32 1, %s6
  %s9 = scalar_select 0, %s8, %s6
  $region1: #{peep_lstm_forward.1} parent=0
    #allocation2 [shape = 'u8[2048]{0}', space=vmem, size = 0x800, scoped, tag = 'output window, operand 0, single buffered']
    #allocation3 [shape = 's32[1]{0}', space=sflag, size = 0x4, scoped, tag = 'scoped memory for peep_lstm_forward.1']
    %10 = vsyncpa [#allocation3], 0
    // Predicated region
    $region2: #{peep_lstm_forward.1} parent=1 // pred_check
      _
    $region3: #{peep_lstm_forward.1} parent=1 // pred_check_branch
      %12 = sbr.rel (0) target = $region5
    $region4: #{peep_lstm_forward.1} parent=1 // pred_region
      _
    $region5: #{peep_lstm_forward.1} parent=1 // pred_fallthru
      _
    // Predicated region
    $region6: #{peep_lstm_forward.1} parent=1 // pred_check
      _
    $region7: #{peep_lstm_forward.1} parent=1 // pred_check_branch
      %14 = sbr.rel (0) target = $region9
    $region8: #{peep_lstm_forward.1} parent=1 // pred_region
      _
    $region9: #{peep_lstm_forward.1} parent=1 // pred_fallthru
      _
    // Predicated region
    $region10: #{peep_lstm_forward.1} parent=1 // pred_check
      _
    $region11: #{peep_lstm_forward.1} parent=1 // pred_check_branch
      %16 = sbr.rel (0) target = $region13
    $region12: #{peep_lstm_forward.1} parent=1 // pred_region
      _
    $region13: #{peep_lstm_forward.1} parent=1 // pred_fallthru
      _
    // Predicated region
    $region14: #{peep_lstm_forward.1} parent=1 // pred_check
      _
    $region15: #{peep_lstm_forward.1} parent=1 // pred_check_branch
      %18 = sbr.rel (0) target = $region17
    $region16: #{peep_lstm_forward.1} parent=1 // pred_region
      _
    $region17: #{peep_lstm_forward.1} parent=1 // pred_fallthru
      _
    // Predicated region
    $region18: #{peep_lstm_forward.1} parent=1 // pred_check
      _
    $region19: #{peep_lstm_forward.1} parent=1 // pred_check_branch
      %20 = sbr.rel (0) target = $region21
    $region20: #{peep_lstm_forward.1} parent=1 // pred_region
      _
    $region21: #{peep_lstm_forward.1} parent=1 // pred_fallthru
      _
    %v21 = vld [vmem:[%s0] sm:$0xff]
    %v22 = vld [vmem:[%s0 + $0x8] sm:$0xff]
    %v23 = vld [vmem:[%s0 + $0x10] sm:$0xff]
    %v24 = vld [vmem:[%s0 + $0x18] sm:$0xff]
    %v25 = vld [vmem:[%s1] sm:$0x7]
    %vm26 = vcmp.eq.s32.totalorder %v21, 0
    %vm27 = vcmp.eq.s32.totalorder %v22, 0
    %vm28 = vcmp.eq.s32.totalorder %v23, 0
    %vm29 = vcmp.eq.s32.totalorder %v24, 0
    %v30 = vsel %vm26, 1, 0
    %v31 = vsel %vm27, 1, 0
    %v32 = vsel %vm28, 1, 0
    %v33 = vsel %vm29, 1, 0
    %v34 = vcvt.s32.f32 %v30
    %v35 = vcvt.s32.f32 %v31
    %v36 = vcvt.s32.f32 %v32
    %v37 = vcvt.s32.f32 %v33
    %39 = vset.pattern.permute.xlu0 0
    %40 = vperm.xlu0 %39, %v34
    %v41 = vpop.permute.xlu0 %40
    %44 = vset.pattern.permute.xlu0 0
    %45 = vperm.xlu0 %44, %v35
    %v46 = vpop.permute.xlu0 %45
    %49 = vset.pattern.permute.xlu0 0
    %50 = vperm.xlu0 %49, %v36
    %v51 = vpop.permute.xlu0 %50
    %54 = vset.pattern.permute.xlu0 0
    %55 = vperm.xlu0 %54, %v37
    %v56 = vpop.permute.xlu0 %55
    %v58 = vperm.slane %v25, 0
    %v59 = vmul.f32 %v41, %v58
    %v60 = vmul.f32 %v46, %v58
    %v61 = vmul.f32 %v51, %v58
    %v62 = vmul.f32 %v56, %v58
    %vm63 = vcmp.eq.s32.totalorder %v21, 1
    %vm64 = vcmp.eq.s32.totalorder %v22, 1
    %vm65 = vcmp.eq.s32.totalorder %v23, 1
    %vm66 = vcmp.eq.s32.totalorder %v24, 1
    %v67 = vsel %vm63, 1, 0
    %v68 = vsel %vm64, 1, 0
    %v69 = vsel %vm65, 1, 0
    %v70 = vsel %vm66, 1, 0
    %v71 = vcvt.s32.f32 %v67
    %v72 = vcvt.s32.f32 %v68
    %v73 = vcvt.s32.f32 %v69
    %v74 = vcvt.s32.f32 %v70
    %76 = vset.pattern.permute.xlu0 0
    %77 = vperm.xlu0 %76, %v71
    %v78 = vpop.permute.xlu0 %77
    %81 = vset.pattern.permute.xlu0 0
    %82 = vperm.xlu0 %81, %v72
    %v83 = vpop.permute.xlu0 %82
    %86 = vset.pattern.permute.xlu0 0
    %87 = vperm.xlu0 %86, %v73
    %v88 = vpop.permute.xlu0 %87
    %91 = vset.pattern.permute.xlu0 0
    %92 = vperm.xlu0 %91, %v74
    %v93 = vpop.permute.xlu0 %92
    %v95 = vperm.slane %v25, 1
    %v96 = vmul.f32 %v78, %v95
    %v97 = vmul.f32 %v83, %v95
    %v98 = vmul.f32 %v88, %v95
    %v99 = vmul.f32 %v93, %v95
    %v100 = vadd.f32 %v59, %v96
    %v101 = vadd.f32 %v60, %v97
    %v102 = vadd.f32 %v61, %v98
    %v103 = vadd.f32 %v62, %v99
    %vm104 = vcmp.eq.s32.totalorder %v21, 2
    %vm105 = vcmp.eq.s32.totalorder %v22, 2
    %vm106 = vcmp.eq.s32.totalorder %v23, 2
    %vm107 = vcmp.eq.s32.totalorder %v24, 2
    %v108 = vsel %vm104, 1, 0
    %v109 = vsel %vm105, 1, 0
    %v110 = vsel %vm106, 1, 0
    %v111 = vsel %vm107, 1, 0
    %v112 = vcvt.s32.f32 %v108
    %v113 = vcvt.s32.f32 %v109
    %v114 = vcvt.s32.f32 %v110
    %v115 = vcvt.s32.f32 %v111
    %117 = vset.pattern.permute.xlu0 0
    %118 = vperm.xlu0 %117, %v112
    %v119 = vpop.permute.xlu0 %118
    %122 = vset.pattern.permute.xlu0 0
    %123 = vperm.xlu0 %122, %v113
    %v124 = vpop.permute.xlu0 %123
    %127 = vset.pattern.permute.xlu0 0
    %128 = vperm.xlu0 %127, %v114
    %v129 = vpop.permute.xlu0 %128
    %132 = vset.pattern.permute.xlu0 0
    %133 = vperm.xlu0 %132, %v115
    %v134 = vpop.permute.xlu0 %133
    %v136 = vperm.slane %v25, 2
    %v137 = vmul.f32 %v119, %v136
    %v138 = vmul.f32 %v124, %v136
    %v139 = vmul.f32 %v129, %v136
    %v140 = vmul.f32 %v134, %v136
    %v141 = vadd.f32 %v100, %v137
    %v142 = vadd.f32 %v101, %v138
    %v143 = vadd.f32 %v102, %v139
    %v144 = vadd.f32 %v103, %v140
    %v145 = vld [vmem:[%s2] sm:$0xff]
    %v146 = vld [vmem:[%s2 + $0x8] sm:$0xff]
    %v147 = vld [vmem:[%s2 + $0x10] sm:$0xff]
    %v148 = vld [vmem:[%s2 + $0x18] sm:$0xff]
    %vm149 = vcmask 261120
    %v151 = vsel %vm149, 0.0, 0
    %153 = vmatpush.msra.mxu0 0.0
    %154 = vmatpush.msra.mxu0 0.0
    %155 = vmatpush.msra.mxu0 0.0
    %156 = vmatpush.msra.mxu0 0.0
    %157 = vmatpush.msra.mxu0 0.0
    %158 = vmatpush.msra.mxu0 0.0
    %159 = vmatpush.msra.mxu0 0.0
    %160 = vmatpush.msra.mxu0 0.0
    %161 = vmatpush.msra.mxu0 0.0
    %162 = vmatpush.msra.mxu0 0.0
    %163 = vmatpush.msra.mxu0 0.0
    %164 = vmatpush.msra.mxu0 0.0
    %165 = vmatpush.msra.mxu0 %v148
    %166 = vmatpush.msra.mxu0 %v147
    %167 = vmatpush.msra.mxu0 %v146
    %168 = vmatpush.msra.mxu0 %v145
    %169 = vmatmul.f32.gmra.mxu0 %v151
    %v170 = vpop.f32.mrf.mxu0
    %v171 = vadd.f32 0.0, %v170
    %172 = vdwg.mxu0
    %v173 = vadd.f32 %v141, %v171
    %v174 = vxor.u32 %v173, 2147483648
    %v175 = vmul.f32 %v174, 1.442695
    %v176 = vpow.pop %v175
    %v177 = vadd.f32 %v176, 1.0
    %v178 = vrcp.pop %v177
    %v179 = vmul.f32 %v177, %v178
    %v180 = vsub.f32 1.0, %v179
    %v181 = vmul.f32 %v178, %v180
    %v182 = vadd.f32 %v178, %v181
    %vm183 = vweird.f32 %v177
    %vm184 = vweird.f32 %v178
    %vm185 = vmor %vm183, %vm184
    %v186 = vsel %vm185, %v178, %v182
    %v187 = vand.u32 2147483647, %v177
    %vm188 = vcmp.eq.f32.partialorder %v187, 8.507059e+37
    %v189 = vand.u32 %v177, 2147483648
    %v190 = vor.u32 1.1754944e-38, %v189
    %v191 = vsel %vm188, %v190, %v186
    %v192 = vmul.f32 1.0, %v191
    %194 = vrot.lane.b32.xlu0 %v192, 64
    %v195 = vpop.permute.xlu0 %194
    %v197 = vmul.f32 %v141, %v195
    %v198 = vmul.f32 %v192, 0.0
    %200 = vrot.lane.b32.xlu0 %v198, 96
    %v201 = vpop.permute.xlu0 %200
    %v203 = vadd.f32 %v197, %v201
    %205 = vrot.lane.b32.xlu0 %v203, 32
    %v206 = vpop.permute.xlu0 %205
    %v207 = vsel %vm149, %v206, 0
    %209 = vmatpush.msra.mxu0 0.0
    %210 = vmatpush.msra.mxu0 0.0
    %211 = vmatpush.msra.mxu0 0.0
    %212 = vmatpush.msra.mxu0 0.0
    %213 = vmatpush.msra.mxu0 0.0
    %214 = vmatpush.msra.mxu0 0.0
    %215 = vmatpush.msra.mxu0 0.0
    %216 = vmatpush.msra.mxu0 0.0
    %217 = vmatpush.msra.mxu0 0.0
    %218 = vmatpush.msra.mxu0 0.0
    %219 = vmatpush.msra.mxu0 0.0
    %220 = vmatpush.msra.mxu0 0.0
    %221 = vmatpush.msra.mxu0 %v148
    %222 = vmatpush.msra.mxu0 %v147
    %223 = vmatpush.msra.mxu0 %v146
    %224 = vmatpush.msra.mxu0 %v145
    %225 = vmatmul.f32.gmra.mxu0 %v207
    %v226 = vpop.f32.mrf.mxu0
    %v227 = vadd.f32 0.0, %v226
    %228 = vdwg.mxu0
    %v230 = vrot.slane %v227, 4
    %v232 = vadd.f32 %v141, %v230
    %v233 = vxor.u32 %v232, 2147483648
    %v234 = vmul.f32 %v233, 1.442695
    %v235 = vpow.pop %v234
    %v236 = vadd.f32 %v235, 1.0
    %v237 = vrcp.pop %v236
    %v238 = vmul.f32 %v236, %v237
    %v239 = vsub.f32 1.0, %v238
    %v240 = vmul.f32 %v237, %v239
    %v241 = vadd.f32 %v237, %v240
    %vm242 = vweird.f32 %v236
    %vm243 = vweird.f32 %v237
    %vm244 = vmor %vm242, %vm243
    %v245 = vsel %vm244, %v237, %v241
    %v246 = vand.u32 2147483647, %v236
    %vm247 = vcmp.eq.f32.partialorder %v246, 8.507059e+37
    %v248 = vand.u32 %v236, 2147483648
    %v249 = vor.u32 1.1754944e-38, %v248
    %v250 = vsel %vm247, %v249, %v245
    %v251 = vmul.f32 1.0, %v250
    %253 = vrot.lane.b32.xlu0 %v251, 64
    %v254 = vpop.permute.xlu0 %253
    %v256 = vmul.f32 %v141, %v254
    %v257 = vrot.slane %v251, 4
    %258 = vrot.lane.b32.xlu0 %v257, 96
    %v259 = vpop.permute.xlu0 %258
    %v261 = vmul.f32 %v203, %v259
    %v263 = vrot.slane %v261, 4
    %v265 = vadd.f32 %v256, %v263
    %v267 = vrot.slane %v265, 4
    %268 = vrot.lane.b32.xlu0 %v267, 32
    %v269 = vpop.permute.xlu0 %268
    %v270 = vsel %vm149, %v269, 0
    %272 = vmatpush.msra.mxu0 0.0
    %273 = vmatpush.msra.mxu0 0.0
    %274 = vmatpush.msra.mxu0 0.0
    %275 = vmatpush.msra.mxu0 0.0
    %276 = vmatpush.msra.mxu0 0.0
    %277 = vmatpush.msra.mxu0 0.0
    %278 = vmatpush.msra.mxu0 0.0
    %279 = vmatpush.msra.mxu0 0.0
    %280 = vmatpush.msra.mxu0 0.0
    %281 = vmatpush.msra.mxu0 0.0
    %282 = vmatpush.msra.mxu0 0.0
    %283 = vmatpush.msra.mxu0 0.0
    %284 = vmatpush.msra.mxu0 %v148
    %285 = vmatpush.msra.mxu0 %v147
    %286 = vmatpush.msra.mxu0 %v146
    %287 = vmatpush.msra.mxu0 %v145
    %288 = vmatmul.f32.gmra.mxu0 %v270
    %v289 = vpop.f32.mrf.mxu0
    %v290 = vadd.f32 0.0, %v289
    %291 = vdwg.mxu0
    %v292 = vadd.f32 %v142, %v290
    %v293 = vxor.u32 %v292, 2147483648
    %v294 = vmul.f32 %v293, 1.442695
    %v295 = vpow.pop %v294
    %v296 = vadd.f32 %v295, 1.0
    %v297 = vrcp.pop %v296
    %v298 = vmul.f32 %v296, %v297
    %v299 = vsub.f32 1.0, %v298
    %v300 = vmul.f32 %v297, %v299
    %v301 = vadd.f32 %v297, %v300
    %vm302 = vweird.f32 %v296
    %vm303 = vweird.f32 %v297
    %vm304 = vmor %vm302, %vm303
    %v305 = vsel %vm304, %v297, %v301
    %v306 = vand.u32 2147483647, %v296
    %vm307 = vcmp.eq.f32.partialorder %v306, 8.507059e+37
    %v308 = vand.u32 %v296, 2147483648
    %v309 = vor.u32 1.1754944e-38, %v308
    %v310 = vsel %vm307, %v309, %v305
    %v311 = vmul.f32 1.0, %v310
    %313 = vrot.lane.b32.xlu0 %v311, 64
    %v314 = vpop.permute.xlu0 %313
    %v316 = vmul.f32 %v142, %v314
    %v317 = vrot.slane %v311, 4
    %318 = vrot.lane.b32.xlu0 %v317, 96
    %v319 = vpop.permute.xlu0 %318
    %v321 = vmul.f32 %v265, %v319
    %v323 = vrot.slane %v321, 4
    %v325 = vadd.f32 %v316, %v323
    %327 = vrot.lane.b32.xlu0 %v325, 32
    %v328 = vpop.permute.xlu0 %327
    %v329 = vsel %vm149, %v328, 0
    %331 = vmatpush.msra.mxu0 0.0
    %332 = vmatpush.msra.mxu0 0.0
    %333 = vmatpush.msra.mxu0 0.0
    %334 = vmatpush.msra.mxu0 0.0
    %335 = vmatpush.msra.mxu0 0.0
    %336 = vmatpush.msra.mxu0 0.0
    %337 = vmatpush.msra.mxu0 0.0
    %338 = vmatpush.msra.mxu0 0.0
    %339 = vmatpush.msra.mxu0 0.0
    %340 = vmatpush.msra.mxu0 0.0
    %341 = vmatpush.msra.mxu0 0.0
    %342 = vmatpush.msra.mxu0 0.0
    %343 = vmatpush.msra.mxu0 %v148
    %344 = vmatpush.msra.mxu0 %v147
    %345 = vmatpush.msra.mxu0 %v146
    %346 = vmatpush.msra.mxu0 %v145
    %347 = vmatmul.f32.gmra.mxu0 %v329
    %v348 = vpop.f32.mrf.mxu0
    %v349 = vadd.f32 0.0, %v348
    %350 = vdwg.mxu0
    %v352 = vrot.slane %v349, 4
    %v354 = vadd.f32 %v142, %v352
    %v355 = vxor.u32 %v354, 2147483648
    %v356 = vmul.f32 %v355, 1.442695
    %v357 = vpow.pop %v356
    %v358 = vadd.f32 %v357, 1.0
    %v359 = vrcp.pop %v358
    %v360 = vmul.f32 %v358, %v359
    %v361 = vsub.f32 1.0, %v360
    %v362 = vmul.f32 %v359, %v361
    %v363 = vadd.f32 %v359, %v362
    %vm364 = vweird.f32 %v358
    %vm365 = vweird.f32 %v359
    %vm366 = vmor %vm364, %vm365
    %v367 = vsel %vm366, %v359, %v363
    %v368 = vand.u32 2147483647, %v358
    %vm369 = vcmp.eq.f32.partialorder %v368, 8.507059e+37
    %v370 = vand.u32 %v358, 2147483648
    %v371 = vor.u32 1.1754944e-38, %v370
    %v372 = vsel %vm369, %v371, %v367
    %v373 = vmul.f32 1.0, %v372
    %375 = vrot.lane.b32.xlu0 %v373, 64
    %v376 = vpop.permute.xlu0 %375
    %v378 = vmul.f32 %v142, %v376
    %v379 = vrot.slane %v373, 4
    %380 = vrot.lane.b32.xlu0 %v379, 96
    %v381 = vpop.permute.xlu0 %380
    %v383 = vmul.f32 %v325, %v381
    %v385 = vrot.slane %v383, 4
    %v387 = vadd.f32 %v378, %v385
    %v389 = vrot.slane %v387, 4
    %390 = vrot.lane.b32.xlu0 %v389, 32
    %v391 = vpop.permute.xlu0 %390
    %v392 = vsel %vm149, %v391, 0
    %394 = vmatpush.msra.mxu0 0.0
    %395 = vmatpush.msra.mxu0 0.0
    %396 = vmatpush.msra.mxu0 0.0
    %397 = vmatpush.msra.mxu0 0.0
    %398 = vmatpush.msra.mxu0 0.0
    %399 = vmatpush.msra.mxu0 0.0
    %400 = vmatpush.msra.mxu0 0.0
    %401 = vmatpush.msra.mxu0 0.0
    %402 = vmatpush.msra.mxu0 0.0
    %403 = vmatpush.msra.mxu0 0.0
    %404 = vmatpush.msra.mxu0 0.0
    %405 = vmatpush.msra.mxu0 0.0
    %406 = vmatpush.msra.mxu0 %v148
    %407 = vmatpush.msra.mxu0 %v147
    %408 = vmatpush.msra.mxu0 %v146
    %409 = vmatpush.msra.mxu0 %v145
    %410 = vmatmul.f32.gmra.mxu0 %v392
    %v411 = vpop.f32.mrf.mxu0
    %v412 = vadd.f32 0.0, %v411
    %413 = vdwg.mxu0
    %v414 = vadd.f32 %v143, %v412
    %v415 = vxor.u32 %v414, 2147483648
    %v416 = vmul.f32 %v415, 1.442695
    %v417 = vpow.pop %v416
    %v418 = vadd.f32 %v417, 1.0
    %v419 = vrcp.pop %v418
    %v420 = vmul.f32 %v418, %v419
    %v421 = vsub.f32 1.0, %v420
    %v422 = vmul.f32 %v419, %v421
    %v423 = vadd.f32 %v419, %v422
    %vm424 = vweird.f32 %v418
    %vm425 = vweird.f32 %v419
    %vm426 = vmor %vm424, %vm425
    %v427 = vsel %vm426, %v419, %v423
    %v428 = vand.u32 2147483647, %v418
    %vm429 = vcmp.eq.f32.partialorder %v428, 8.507059e+37
    %v430 = vand.u32 %v418, 2147483648
    %v431 = vor.u32 1.1754944e-38, %v430
    %v432 = vsel %vm429, %v431, %v427
    %v433 = vmul.f32 1.0, %v432
    %435 = vrot.lane.b32.xlu0 %v433, 64
    %v436 = vpop.permute.xlu0 %435
    %v438 = vmul.f32 %v143, %v436
    %v439 = vrot.slane %v433, 4
    %440 = vrot.lane.b32.xlu0 %v439, 96
    %v441 = vpop.permute.xlu0 %440
    %v443 = vmul.f32 %v387, %v441
    %v445 = vrot.slane %v443, 4
    %v447 = vadd.f32 %v438, %v445
    %449 = vrot.lane.b32.xlu0 %v447, 32
    %v450 = vpop.permute.xlu0 %449
    %v451 = vsel %vm149, %v450, 0
    %453 = vmatpush.msra.mxu0 0.0
    %454 = vmatpush.msra.mxu0 0.0
    %455 = vmatpush.msra.mxu0 0.0
    %456 = vmatpush.msra.mxu0 0.0
    %457 = vmatpush.msra.mxu0 0.0
    %458 = vmatpush.msra.mxu0 0.0
    %459 = vmatpush.msra.mxu0 0.0
    %460 = vmatpush.msra.mxu0 0.0
    %461 = vmatpush.msra.mxu0 0.0
    %462 = vmatpush.msra.mxu0 0.0
    %463 = vmatpush.msra.mxu0 0.0
    %464 = vmatpush.msra.mxu0 0.0
    %465 = vmatpush.msra.mxu0 %v148
    %466 = vmatpush.msra.mxu0 %v147
    %467 = vmatpush.msra.mxu0 %v146
    %468 = vmatpush.msra.mxu0 %v145
    %469 = vmatmul.f32.gmra.mxu0 %v451
    %v470 = vpop.f32.mrf.mxu0
    %v471 = vadd.f32 0.0, %v470
    %472 = vdwg.mxu0
    %v474 = vrot.slane %v471, 4
    %v476 = vadd.f32 %v143, %v474
    %v477 = vxor.u32 %v476, 2147483648
    %v478 = vmul.f32 %v477, 1.442695
    %v479 = vpow.pop %v478
    %v480 = vadd.f32 %v479, 1.0
    %v481 = vrcp.pop %v480
    %v482 = vmul.f32 %v480, %v481
    %v483 = vsub.f32 1.0, %v482
    %v484 = vmul.f32 %v481, %v483
    %v485 = vadd.f32 %v481, %v484
    %vm486 = vweird.f32 %v480
    %vm487 = vweird.f32 %v481
    %vm488 = vmor %vm486, %vm487
    %v489 = vsel %vm488, %v481, %v485
    %v490 = vand.u32 2147483647, %v480
    %vm491 = vcmp.eq.f32.partialorder %v490, 8.507059e+37
    %v492 = vand.u32 %v480, 2147483648
    %v493 = vor.u32 1.1754944e-38, %v492
    %v494 = vsel %vm491, %v493, %v489
    %v495 = vmul.f32 1.0, %v494
    %497 = vrot.lane.b32.xlu0 %v495, 64
    %v498 = vpop.permute.xlu0 %497
    %v500 = vmul.f32 %v143, %v498
    %v501 = vrot.slane %v495, 4
    %502 = vrot.lane.b32.xlu0 %v501, 96
    %v503 = vpop.permute.xlu0 %502
    %v505 = vmul.f32 %v447, %v503
    %v507 = vrot.slane %v505, 4
    %v509 = vadd.f32 %v500, %v507
    %v511 = vrot.slane %v509, 4
    %512 = vrot.lane.b32.xlu0 %v511, 32
    %v513 = vpop.permute.xlu0 %512
    %v514 = vsel %vm149, %v513, 0
    %516 = vmatpush.msra.mxu0 0.0
    %517 = vmatpush.msra.mxu0 0.0
    %518 = vmatpush.msra.mxu0 0.0
    %519 = vmatpush.msra.mxu0 0.0
    %520 = vmatpush.msra.mxu0 0.0
    %521 = vmatpush.msra.mxu0 0.0
    %522 = vmatpush.msra.mxu0 0.0
    %523 = vmatpush.msra.mxu0 0.0
    %524 = vmatpush.msra.mxu0 0.0
    %525 = vmatpush.msra.mxu0 0.0
    %526 = vmatpush.msra.mxu0 0.0
    %527 = vmatpush.msra.mxu0 0.0
    %528 = vmatpush.msra.mxu0 %v148
    %529 = vmatpush.msra.mxu0 %v147
    %530 = vmatpush.msra.mxu0 %v146
    %531 = vmatpush.msra.mxu0 %v145
    %532 = vmatmul.f32.gmra.mxu0 %v514
    %v533 = vpop.f32.mrf.mxu0
    %v534 = vadd.f32 0.0, %v533
    %535 = vdwg.mxu0
    %v536 = vadd.f32 %v144, %v534
    %v537 = vxor.u32 %v536, 2147483648
    %v538 = vmul.f32 %v537, 1.442695
    %v539 = vpow.pop %v538
    %v540 = vadd.f32 %v539, 1.0
    %v541 = vrcp.pop %v540
    %v542 = vmul.f32 %v540, %v541
    %v543 = vsub.f32 1.0, %v542
    %v544 = vmul.f32 %v541, %v543
    %v545 = vadd.f32 %v541, %v544
    %vm546 = vweird.f32 %v540
    %vm547 = vweird.f32 %v541
    %vm548 = vmor %vm546, %vm547
    %v549 = vsel %vm548, %v541, %v545
    %v550 = vand.u32 2147483647, %v540
    %vm551 = vcmp.eq.f32.partialorder %v550, 8.507059e+37
    %v552 = vand.u32 %v540, 2147483648
    %v553 = vor.u32 1.1754944e-38, %v552
    %v554 = vsel %vm551, %v553, %v549
    %v555 = vmul.f32 1.0, %v554
    %557 = vrot.lane.b32.xlu0 %v555, 64
    %v558 = vpop.permute.xlu0 %557
    %v560 = vmul.f32 %v144, %v558
    %v561 = vrot.slane %v555, 4
    %562 = vrot.lane.b32.xlu0 %v561, 96
    %v563 = vpop.permute.xlu0 %562
    %v565 = vmul.f32 %v509, %v563
    %v567 = vrot.slane %v565, 4
    %v569 = vadd.f32 %v560, %v567
    %571 = vrot.lane.b32.xlu0 %v569, 32
    %v572 = vpop.permute.xlu0 %571
    %v573 = vsel %vm149, %v572, 0
    %575 = vmatpush.msra.mxu0 0.0
    %576 = vmatpush.msra.mxu0 0.0
    %577 = vmatpush.msra.mxu0 0.0
    %578 = vmatpush.msra.mxu0 0.0
    %579 = vmatpush.msra.mxu0 0.0
    %580 = vmatpush.msra.mxu0 0.0
    %581 = vmatpush.msra.mxu0 0.0
    %582 = vmatpush.msra.mxu0 0.0
    %583 = vmatpush.msra.mxu0 0.0
    %584 = vmatpush.msra.mxu0 0.0
    %585 = vmatpush.msra.mxu0 0.0
    %586 = vmatpush.msra.mxu0 0.0
    %587 = vmatpush.msra.mxu0 %v148
    %588 = vmatpush.msra.mxu0 %v147
    %589 = vmatpush.msra.mxu0 %v146
    %590 = vmatpush.msra.mxu0 %v145
    %591 = vmatmul.f32.gmra.mxu0 %v573
    %v592 = vpop.f32.mrf.mxu0
    %v593 = vadd.f32 0.0, %v592
    %594 = vdwg.mxu0
    %v596 = vrot.slane %v593, 4
    %v598 = vadd.f32 %v144, %v596
    %v599 = vxor.u32 %v598, 2147483648
    %v600 = vmul.f32 %v599, 1.442695
    %v601 = vpow.pop %v600
    %v602 = vadd.f32 %v601, 1.0
    %v603 = vrcp.pop %v602
    %v604 = vmul.f32 %v602, %v603
    %v605 = vsub.f32 1.0, %v604
    %v606 = vmul.f32 %v603, %v605
    %v607 = vadd.f32 %v603, %v606
    %vm608 = vweird.f32 %v602
    %vm609 = vweird.f32 %v603
    %vm610 = vmor %vm608, %vm609
    %v611 = vsel %vm610, %v603, %v607
    %v612 = vand.u32 2147483647, %v602
    %vm613 = vcmp.eq.f32.partialorder %v612, 8.507059e+37
    %v614 = vand.u32 %v602, 2147483648
    %v615 = vor.u32 1.1754944e-38, %v614
    %v616 = vsel %vm613, %v615, %v611
    %v617 = vmul.f32 1.0, %v616
    %619 = vrot.lane.b32.xlu0 %v617, 64
    %v620 = vpop.permute.xlu0 %619
    %v622 = vmul.f32 %v144, %v620
    %v623 = vrot.slane %v617, 4
    %624 = vrot.lane.b32.xlu0 %v623, 96
    %v625 = vpop.permute.xlu0 %624
    %v627 = vmul.f32 %v569, %v625
    %v629 = vrot.slane %v627, 4
    %v631 = vadd.f32 %v622, %v629
    %v632 = vtanh.pop %v631
    %633 = vrot.lane.b32.xlu0 %v617, 32
    %v634 = vpop.permute.xlu0 %633
    %v636 = vmul.f32 %v632, %v634
    %v637 = vld [vmem:[%s3] sm:$0xff]
    %v638 = vld [vmem:[%s3 + $0x8] sm:$0xff]
    %v639 = vld [vmem:[%s3 + $0x10] sm:$0xff]
    %v640 = vld [vmem:[%s3 + $0x18] sm:$0xff]
    %v641 = vld [vmem:[%s4] sm:$0x1]
    %v643 = vperm.slane %v641, 0
    %v646 = vrot.slane %v636, 4
    %647 = vrot.lane.b32.xlu0 %v646, 32
    %v648 = vpop.permute.xlu0 %647
    %v649 = vsel %vm149, %v648, 0
    %651 = vmatpush.msra.mxu0 0.0
    %652 = vmatpush.msra.mxu0 0.0
    %653 = vmatpush.msra.mxu0 0.0
    %654 = vmatpush.msra.mxu0 0.0
    %655 = vmatpush.msra.mxu0 0.0
    %656 = vmatpush.msra.mxu0 0.0
    %657 = vmatpush.msra.mxu0 0.0
    %658 = vmatpush.msra.mxu0 0.0
    %659 = vmatpush.msra.mxu0 0.0
    %660 = vmatpush.msra.mxu0 0.0
    %661 = vmatpush.msra.mxu0 0.0
    %662 = vmatpush.msra.mxu0 0.0
    %663 = vmatpush.msra.mxu0 %v640
    %664 = vmatpush.msra.mxu0 %v639
    %665 = vmatpush.msra.mxu0 %v638
    %666 = vmatpush.msra.mxu0 %v637
    %667 = vmatmul.f32.gmra.mxu0 %v649
    %v668 = vpop.f32.mrf.mxu0
    %v669 = vadd.f32 %v643, %v668
    %670 = vdwg.mxu0
    %vm671 = vcmask 76800
    %v672 = vsel %vm671, %v669, -inf
    %673 = vmax.xlane.f32.xlu0 %v672
    %v674 = vpop.xlane.xlu0 %673
    %v675 = vsub.f32 %v669, %v674
    %v676 = vmul.f32 %v675, 1.442695
    %v677 = vpow.pop %v676
    %v678 = vsel %vm671, %v677, 0.0
    %679 = vadd.xlane.f32.xlu0 %v678
    %v680 = vpop.xlane.xlu0 %679
    %v681 = vlog2.pop %v680
    %v682 = vmul.f32 %v681, 0.6931472
    %v683 = vsub.f32 %v675, %v682
    %684 = vst.msk [vmem:[#allocation2] sm:$0xf] %vm671, %v683
    // Predicated region
    $region22: #{peep_lstm_forward.1} parent=1 // pred_check
      _
    $region23: #{peep_lstm_forward.1} parent=1 // pred_check_branch
      %686 = sbr.rel (0) target = $region25
    $region24: #{peep_lstm_forward.1} parent=1 // pred_region
      %688 = vsyncadd [#allocation3], 0
      %s690 = sshll.u32 [#allocation2], 4
      %s691 = int_to_ptr.vmem [resolvable:$true] %s690
      %s692 = sshll.u32 %s5, 4
      %s693 = int_to_ptr.hbm [resolvable:$true] %s692
      %695 = dma.vmem_to_hbm [thread:$0]  %s691, 64, %s693, [#allocation3]
    $region25: #{peep_lstm_forward.1} parent=1 // pred_fallthru
      _
    // Predicated region
    $region26: #{peep_lstm_forward.1} parent=1 // pred_check
      _
    $region27: #{peep_lstm_forward.1} parent=1 // pred_check_branch
      %697 = sbr.rel (0) target = $region29
    $region28: #{peep_lstm_forward.1} parent=1 // pred_region
      %699 = dma.done [#allocation3], 64
    $region29: #{peep_lstm_forward.1} parent=1 // pred_fallthru
      _
    %700 = vsyncpa [#allocation3], 1

</llo_original>
